<compile_context>
chip_gen: v7x
topology: tpu7x:2x2x1
jax: 0.10.0
libtpu: 0.0.40
codegen_flags: <defaults>
</compile_context>

<pallas_src>
import functools

import jax
import jax.numpy as jnp
from jax.experimental import pallas as pl
from jax.experimental.pallas import tpu as pltpu


def find_multiple(n: int, k: int) -> int:
    if n % k == 0:
        return n
    return n + k - n % k


def _cdiv(a: int, b: int) -> int:
    return -(-a // b)


def _vmem_capacity_bytes() -> int:
    """Physical VMEM per TensorCore; falls back to 64 MiB (v7x, the smallest current gen)."""
    default = 64 * 1024 * 1024
    try:
        info = pltpu.get_tpu_info()
        cap = getattr(info, "vmem_capacity_bytes", None)
        return int(cap) if cap else default
    except Exception:
        return default


def _vmem_budget_bytes() -> int:
    # ~70% of physical: leaves headroom for compiler internal scratch / pipelining overheads.
    return int(_vmem_capacity_bytes() * 0.70)


def _tile_vmem_bytes(tm: int, ti: int, D: int) -> int:
    """VMEM for one grid step, INCLUDING compiler-managed in-kernel temporaries."""
    bf16, f32 = 2, 4
    x_tiles = 2 * tm * D * bf16             # double-buffered activation tile
    w13_tiles = 2 * D * (2 * ti) * bf16     # double-buffered fused [w1^T | w3^T] tile
    w2_tiles = 2 * ti * D * bf16            # double-buffered w2^T tile
    out_tiles = 2 * tm * D * bf16           # double-buffered bf16 output tile
    acc = tm * D * f32                      # f32 accumulator scratch
    # In-kernel temporaries: h (tm, 2*ti) f32, gate g (f32 + its bf16 MXU copy),
    # and the stage-2 dot result (tm, D) f32 feeding the accumulate.
    temps = tm * (2 * ti) * f32 + tm * ti * (f32 + bf16) + tm * D * f32
    return x_tiles + w13_tiles + w2_tiles + out_tiles + acc + temps


def choose_intermediate_tile(D: int, I: int, *, budget: int | None = None) -> int:
    """Intermediate-axis tile (multiple of 128), sized against the device VMEM budget."""
    if budget is None:
        budget = _vmem_budget_bytes()
    ti = min(find_multiple(I, 128), 2048)
    # Size against a nominal 256-token tile so per-call token tiles still have room.
    while ti > 128 and _tile_vmem_bytes(256, ti, D) > budget:
        ti -= 128
    return ti


def choose_tm(M: int, D: int, ti: int, *, budget: int) -> int:
    """Token tile: largest cap that fits VMEM (incl. temporaries), then balanced against M.

    Balancing (cdiv-based) avoids padding M just above a boundary to ~2x the work.  Note: on
    v5e ~256 already reaches the MXU roofline; larger caps are harmless with balanced tiles.
    """
    cap = 16
    for c in (1024, 512, 256, 128, 64, 32, 16):
        if _tile_vmem_bytes(c, ti, D) <= budget:
            cap = c
            break
    n_tiles = max(1, _cdiv(M, cap))
    return min(cap, find_multiple(_cdiv(M, n_tiles), 16))   # multiple of 16 (bf16 sublanes)


def prepare_ffn_weights(w1, w3, w2, *, ti: int | None = None, dtype=jnp.bfloat16):
    """One-time weight prep (parameter-load time, NOT per forward call).

    w1, w3: (I, D) and w2: (D, I) in PyTorch nn.Linear (out, in) layout.
    Returns tile-contiguous streamed weights:
      w13: (n_i, D, 2*ti) bf16 -- block j = [w1^T[:, j*ti:(j+1)*ti] | w3^T[:, j*ti:(j+1)*ti]]
      w2t: (n_i, ti, D)   bf16 -- block j = w2^T[j*ti:(j+1)*ti, :]
    `ti` is recorded in the shapes, so feed_forward cannot be called with a mismatched tile.
    """
    # TODO(synk): optional fp8 weight path for v7x (fp8 MXU) when quality permits.
    I, D = w1.shape
    if ti is None:
        ti = choose_intermediate_tile(D, I)
    I_pad = find_multiple(I, ti)

    w1t = w1.T.astype(dtype)    # (D, I)
    w3t = w3.T.astype(dtype)    # (D, I)
    w2t = w2.T.astype(dtype)    # (I, D)
    if I_pad != I:
        pad = I_pad - I
        w1t = jnp.pad(w1t, ((0, 0), (0, pad)))
        w3t = jnp.pad(w3t, ((0, 0), (0, pad)))
        w2t = jnp.pad(w2t, ((0, pad), (0, 0)))    # zero rows -> zero contribution

    n_i = I_pad // ti
    w13 = jnp.concatenate([w1t.reshape(D, n_i, ti), w3t.reshape(D, n_i, ti)], axis=-1)
    w13 = jnp.transpose(w13, (1, 0, 2))           # (n_i, D, 2*ti) tile-contiguous in HBM
    w2t = w2t.reshape(n_i, ti, D)                 # (n_i, ti, D)   tile-contiguous in HBM
    return w13, w2t


def ffn_kernel(x_ref, w13_ref, w2t_ref, o_ref, acc_ref, *, ti):
    # x_ref:   (tm, D)       bf16 token tile (resident across the inner intermediate axis)
    # w13_ref: (1, D, 2*ti)  bf16 fused [w1^T | w3^T] tile
    # w2t_ref: (1, ti, D)    bf16 w2^T tile
    # o_ref:   (1, tm, D)    bf16 output tile (written on the last intermediate step)
    # acc_ref: (tm, D)       f32 accumulator scratch
    j = pl.program_id(2)

    x = x_ref[...]
    h = jnp.dot(x, w13_ref[0], preferred_element_type=jnp.float32)    # (tm, 2*ti) f32
    h1 = h[:, :ti]                                                    # 128-aligned lane split
    h3 = h[:, ti:]
    g = (h1 * jax.nn.sigmoid(h1)) * h3                                # SiLU gate in f32
    contrib = jnp.dot(g.astype(w2t_ref.dtype), w2t_ref[0],
                      preferred_element_type=jnp.float32)             # (tm, D) f32

    @pl.when(j == 0)
    def _():
        acc_ref[...] = contrib            # direct write: no zero-fill store + add

    @pl.when(j > 0)
    def _():
        acc_ref[...] += contrib

    @pl.when(j == pl.num_programs(2) - 1)
    def _():
        o_ref[0] = acc_ref[...].astype(o_ref.dtype)


def feed_forward(x, w13, w2t, *, out_dtype=None, num_core_splits=None):
    """x: (..., D).  w13: (n_i, D, 2*ti), w2t: (n_i, ti, D) from prepare_ffn_weights.

    Returns bf16 by default (per perf review: avoids a separate full-output cast pass and
    halves writeback); pass out_dtype=jnp.float32 if the original module dtype is required.
    """
    orig_shape = x.shape
    D = orig_shape[-1]
    n_i, ti, D_w = w2t.shape
    assert D_w == D and w13.shape == (n_i, D, 2 * ti), (
        "prepared weights do not match this (D, ti); re-run prepare_ffn_weights")

    compute_dtype = jnp.bfloat16
    if out_dtype is None:
        out_dtype = compute_dtype
    budget = _vmem_budget_bytes()

    x2 = x.reshape(-1, D).astype(compute_dtype)   # cast BEFORE pad: one pre-kernel pass
    M = x2.shape[0]
    tm = choose_tm(M, D, ti, budget=budget)
    M_pad = find_multiple(M, tm)
    if M_pad != M:
        x2 = jnp.pad(x2, ((0, M_pad - M), (0, 0)))   # zero rows, sliced off below

    n_tm = M_pad // tm
    # Decode-sized inputs (single token tile) would otherwise use only one of v7x's two
    # TensorCores; split the intermediate axis across a leading parallel grid axis and sum
    # the (tiny) partials in the wrapper.  No-op split for prefill / odd n_i.
    if num_core_splits is None:
        num_core_splits = 2 if (n_tm == 1 and n_i % 2 == 0) else 1
    ns = num_core_splits
    assert n_i % ns == 0, "num_core_splits must divide the number of intermediate tiles"
    nj = n_i // ns

    # TODO(synk): for very small tm (decode) try pipeline_mode=pl.Buffered(3) on the two
    # weight BlockSpecs to hide per-step DMA issue latency (measure; costs one extra tile).
    out3 = pl.pallas_call(
        functools.partial(ffn_kernel, ti=ti),
        out_shape=jax.ShapeDtypeStruct((ns, M_pad, D), out_dtype),
        grid_spec=pltpu.PrefetchScalarGridSpec(
            num_scalar_prefetch=0,
            grid=(ns, n_tm, nj),                                        # reduction axis last
            in_specs=[
                pl.BlockSpec((tm, D), lambda s, i, j: (i, 0)),          # x resident over j
                pl.BlockSpec((1, D, 2 * ti), lambda s, i, j: (s * nj + j, 0, 0)),
                pl.BlockSpec((1, ti, D), lambda s, i, j: (s * nj + j, 0, 0)),
            ],
            out_specs=pl.BlockSpec((1, tm, D), lambda s, i, j: (s, i, 0)),
            scratch_shapes=[pltpu.VMEM((tm, D), jnp.float32)],
        ),
        compiler_params=pltpu.CompilerParams(
            dimension_semantics=("parallel", "parallel", "arbitrary"),
            vmem_limit_bytes=min(int(_vmem_capacity_bytes() * 0.9), 128 * 1024 * 1024),
        ),
    )(x2, w13, w2t)

    out2 = out3.sum(axis=0) if ns > 1 else out3[0]
    return out2[:M].reshape(orig_shape)


if __name__ == "__main__":
    # Small config consistent with ModelArgs.__post_init__:
    # dim=128 -> hidden=512 -> n_hidden=341 -> intermediate_size=find_multiple(341,256)=512
    dim = 128
    intermediate = find_multiple(int(2 * (4 * dim) / 3), 256)   # 512
    batch, seq = 2, 8

    key = jax.random.PRNGKey(0)
    kx, k1, k2, k3 = jax.random.split(key, 4)
    x = jax.random.normal(kx, (batch, seq, dim), dtype=jnp.float32)
    # nn.Linear weight layout: (out_features, in_features)
    w1 = jax.random.normal(k1, (intermediate, dim), dtype=jnp.float32) * 0.02
    w3 = jax.random.normal(k3, (intermediate, dim), dtype=jnp.float32) * 0.02
    w2 = jax.random.normal(k2, (dim, intermediate), dtype=jnp.float32) * 0.02

    # Pure-JAX f32 reference (same math as the PyTorch module); bf16 MXU path -> loose tol.
    ref_full = (jax.nn.silu(x @ w1.T) * (x @ w3.T)) @ w2.T

    # 1) Default path (single intermediate tile).
    w13, w2t = prepare_ffn_weights(w1, w3, w2)                   # once, at parameter-load time
    out = jax.block_until_ready(feed_forward(x, w13, w2t))
    assert out.shape == x.shape
    err = float(jnp.max(jnp.abs(out.astype(jnp.float32) - ref_full)))
    assert jnp.allclose(out.astype(jnp.float32), ref_full, atol=5e-3, rtol=5e-2), err

    # 2) Non-divisible token count (padding path): M = 14 is not a tile multiple.
    x_odd = x[:, : seq - 1, :]
    out_odd = jax.block_until_ready(feed_forward(x_odd, w13, w2t))
    ref_odd = (jax.nn.silu(x_odd @ w1.T) * (x_odd @ w3.T)) @ w2.T
    assert jnp.allclose(out_odd.astype(jnp.float32), ref_odd, atol=5e-3, rtol=5e-2)

    # 3) Multi-tile intermediate axis + decode-time intermediate split across TensorCores.
    w13_b, w2t_b = prepare_ffn_weights(w1, w3, w2, ti=256)       # n_i = 2
    out_b = jax.block_until_ready(feed_forward(x, w13_b, w2t_b))
    assert jnp.allclose(out_b.astype(jnp.float32), ref_full, atol=5e-3, rtol=5e-2)

    print("KERNEL_OK")
</pallas_src>

<mosaic_0001>
module attributes {stable_mosaic.version = 11 : i64} {
  func.func @ffn_kernel(%arg0: i32, %arg1: i32, %arg2: i32, %arg3: memref<16x128xbf16, #tpu.memory_space<vmem>>, %arg4: memref<1x128x1024xbf16, #tpu.memory_space<vmem>>, %arg5: memref<1x512x128xbf16, #tpu.memory_space<vmem>>, %arg6: memref<1x16x128xbf16, #tpu.memory_space<vmem>>, %arg7: memref<16x128xf32, #tpu.memory_space<vmem>>) attributes {dimension_semantics = [#tpu.dimension_semantics<parallel>, #tpu.dimension_semantics<parallel>, #tpu.dimension_semantics<arbitrary>], iteration_bounds = array<i64: 1, 1, 1>, scalar_prefetch = 0 : i64, scratch_operands = 1 : i64, tpu.core_type = #tpu.core_type<tc>, window_params = [{transform_indices = @transform_0, window_bounds = array<i64: 16, 128>}, {transform_indices = @transform_1, window_bounds = array<i64: 1, 128, 1024>}, {transform_indices = @transform_2, window_bounds = array<i64: 1, 512, 128>}, {transform_indices = @transform_3, window_bounds = array<i64: 1, 16, 128>}]} {
    %c0 = arith.constant 0 : index
    %c0_0 = arith.constant 0 : index
    %0 = vector.load %arg3[%c0, %c0_0] : memref<16x128xbf16, #tpu.memory_space<vmem>>, vector<16x128xbf16>
    %c0_1 = arith.constant 0 : index
    %c0_2 = arith.constant 0 : index
    %c0_3 = arith.constant 0 : index
    %1 = vector.load %arg4[%c0_1, %c0_2, %c0_3] : memref<1x128x1024xbf16, #tpu.memory_space<vmem>>, vector<1x128x1024xbf16>
    %2 = vector.shape_cast %1 : vector<1x128x1024xbf16> to vector<128x1024xbf16>
    %cst = arith.constant dense<0.000000e+00> : vector<16x1024xf32>
    %3 = tpu.matmul %0, %2, %cst {dimension_numbers = #tpu.dot_dimension_numbers<[1], [0], [0], [1], [0, 0, 1, 1], [], []>} : vector<16x128xbf16>, vector<128x1024xbf16>, vector<16x1024xf32> -> vector<16x1024xf32>
    %4 = vector.extract_strided_slice %3 {offsets = [0, 0], sizes = [16, 512], strides = [1, 1]} : vector<16x1024xf32> to vector<16x512xf32>
    %5 = vector.extract_strided_slice %3 {offsets = [0, 512], sizes = [16, 512], strides = [1, 1]} : vector<16x1024xf32> to vector<16x512xf32>
    %6 = arith.negf %4 : vector<16x512xf32>
    %7 = math.exp %6 : vector<16x512xf32>
    %cst_4 = arith.constant 1.000000e+00 : f32
    %8 = vector.broadcast %cst_4 : f32 to vector<16x512xf32>
    %9 = arith.addf %8, %7 : vector<16x512xf32>
    %10 = arith.divf %8, %9 : vector<16x512xf32>
    %11 = arith.mulf %4, %10 : vector<16x512xf32>
    %12 = arith.mulf %11, %5 : vector<16x512xf32>
    %13 = arith.truncf %12 : vector<16x512xf32> to vector<16x512xbf16>
    %c0_5 = arith.constant 0 : index
    %c0_6 = arith.constant 0 : index
    %c0_7 = arith.constant 0 : index
    %14 = vector.load %arg5[%c0_5, %c0_6, %c0_7] : memref<1x512x128xbf16, #tpu.memory_space<vmem>>, vector<1x512x128xbf16>
    %15 = vector.shape_cast %14 : vector<1x512x128xbf16> to vector<512x128xbf16>
    %cst_8 = arith.constant dense<0.000000e+00> : vector<16x128xf32>
    %16 = tpu.matmul %13, %15, %cst_8 {dimension_numbers = #tpu.dot_dimension_numbers<[1], [0], [0], [1], [0, 0, 1, 1], [], []>} : vector<16x512xbf16>, vector<512x128xbf16>, vector<16x128xf32> -> vector<16x128xf32>
    %c0_i32 = arith.constant 0 : i32
    %17 = arith.cmpi eq, %arg2, %c0_i32 : i32
    %18 = arith.extui %17 : i1 to i32
    %c0_i32_9 = arith.constant 0 : i32
    %19 = arith.cmpi ne, %18, %c0_i32_9 : i32
    scf.if %19 {
      %c0_14 = arith.constant 0 : index
      %c0_15 = arith.constant 0 : index
      %26 = vector.load %arg7[%c0_14, %c0_15] : memref<16x128xf32, #tpu.memory_space<vmem>>, vector<16x128xf32>
      tpu.vector_store %arg7[%c0_14, %c0_15], %16 {strides = array<i32>} : memref<16x128xf32, #tpu.memory_space<vmem>>, vector<16x128xf32>,
    } else {
    }
    %c0_i32_10 = arith.constant 0 : i32
    %20 = arith.cmpi sgt, %arg2, %c0_i32_10 : i32
    %21 = arith.extui %20 : i1 to i32
    %c0_i32_11 = arith.constant 0 : i32
    %22 = arith.cmpi ne, %21, %c0_i32_11 : i32
    scf.if %22 {
      %c0_14 = arith.constant 0 : index
      %c0_15 = arith.constant 0 : index
      %26 = vector.load %arg7[%c0_14, %c0_15] : memref<16x128xf32, #tpu.memory_space<vmem>>, vector<16x128xf32>
      %27 = arith.addf %26, %16 : vector<16x128xf32>
      %c0_16 = arith.constant 0 : index
      %c0_17 = arith.constant 0 : index
      %28 = vector.load %arg7[%c0_16, %c0_17] : memref<16x128xf32, #tpu.memory_space<vmem>>, vector<16x128xf32>
      tpu.vector_store %arg7[%c0_16, %c0_17], %27 {strides = array<i32>} : memref<16x128xf32, #tpu.memory_space<vmem>>, vector<16x128xf32>,
    } else {
    }
    %c0_i32_12 = arith.constant 0 : i32
    %23 = arith.cmpi eq, %arg2, %c0_i32_12 : i32
    %24 = arith.extui %23 : i1 to i32
    %c0_i32_13 = arith.constant 0 : i32
    %25 = arith.cmpi ne, %24, %c0_i32_13 : i32
    scf.if %25 {
      %c0_14 = arith.constant 0 : index
      %c0_15 = arith.constant 0 : index
      %26 = vector.load %arg7[%c0_14, %c0_15] : memref<16x128xf32, #tpu.memory_space<vmem>>, vector<16x128xf32>
      %27 = arith.truncf %26 : vector<16x128xf32> to vector<16x128xbf16>
      %c0_16 = arith.constant 0 : index
      %c0_17 = arith.constant 0 : index
      %c0_18 = arith.constant 0 : index
      %28 = vector.load %arg6[%c0_16, %c0_17, %c0_18] : memref<1x16x128xbf16, #tpu.memory_space<vmem>>, vector<1x16x128xbf16>
      %29 = vector.shape_cast %28 : vector<1x16x128xbf16> to vector<16x128xbf16>
      %30 = vector.shape_cast %27 : vector<16x128xbf16> to vector<1x16x128xbf16>
      tpu.vector_store %arg6[%c0_16, %c0_17, %c0_18], %30 {strides = array<i32>} : memref<1x16x128xbf16, #tpu.memory_space<vmem>>, vector<1x16x128xbf16>,
    } else {
    }
    return
  }
  func.func @transform_0(%arg0: i32, %arg1: i32, %arg2: i32) -> (i32, i32) {
    %c0_i32 = arith.constant 0 : i32
    %c0_i32_0 = arith.constant 0 : i32
    return %arg1, %c0_i32 : i32, i32
  }
  func.func @transform_1(%arg0: i32, %arg1: i32, %arg2: i32) -> (i32, i32, i32) {
    %c1_i32 = arith.constant 1 : i32
    %0 = arith.muli %arg0, %c1_i32 : i32
    %1 = arith.addi %0, %arg2 : i32
    %c0_i32 = arith.constant 0 : i32
    %c0_i32_0 = arith.constant 0 : i32
    %c0_i32_1 = arith.constant 0 : i32
    return %1, %c0_i32, %c0_i32_0 : i32, i32, i32
  }
  func.func @transform_2(%arg0: i32, %arg1: i32, %arg2: i32) -> (i32, i32, i32) {
    %c1_i32 = arith.constant 1 : i32
    %0 = arith.muli %arg0, %c1_i32 : i32
    %1 = arith.addi %0, %arg2 : i32
    %c0_i32 = arith.constant 0 : i32
    %c0_i32_0 = arith.constant 0 : i32
    %c0_i32_1 = arith.constant 0 : i32
    return %1, %c0_i32, %c0_i32_0 : i32, i32, i32
  }
  func.func @transform_3(%arg0: i32, %arg1: i32, %arg2: i32) -> (i32, i32, i32) {
    %c0_i32 = arith.constant 0 : i32
    %c0_i32_0 = arith.constant 0 : i32
    return %arg0, %arg1, %c0_i32 : i32, i32, i32
  }
}

</mosaic_0001>

<llo_original>
// kernel: tpu_custom_call.1
$region0: #{tpu_custom_call.1}
  #allocation0 [shape = 'u32[]', space=smem, size = 0x4, offset = 0x4, fixed_abs, tag = 'smem constant byte address 0x4 - core index']
  #allocation1 [shape = 'u32[144,128]{1,0:T(1,128)}', space=vmem, size = 0x12000, scoped, tag = 'internal scratch']
  #allocation2 [shape = 'f32[16,128]{1,0:T(8,128)}', space=vmem, size = 0x2000, scoped, tag = 'scratch operand']
  %s0 = inlined_call_operand.hbm [shape: bf16[16,128], index: 0, kind: input, shape index: {}]
  %s1 = inlined_call_operand.hbm [shape: bf16[1,128,1024], index: 1, kind: input, shape index: {}]
  %s2 = inlined_call_operand.hbm [shape: bf16[1,512,128], index: 2, kind: input, shape index: {}]
  %s3 = inlined_call_operand.hbm [shape: bf16[1,16,128], index: 3, kind: output, shape index: {}]
  %s4 = sld [smem:[#allocation0]]
  $region46: #{tpu_custom_call.1} parent=0
    _
  %s6 = ssub.s32 1, %s4
  %s7 = scalar_select 0, %s6, %s4
  $region1: #{tpu_custom_call.1} parent=0
    #allocation3 [shape = 'u8[4096]{0}', space=vmem, size = 0x1000, scoped, tag = 'input window, operand 0, single buffered']
    #allocation4 [shape = 's32[1]{0}', space=sflag, size = 0x4, scoped, tag = 'scoped memory for tpu_custom_call.1']
    #allocation5 [shape = 's32[1]{0}', space=sflag, size = 0x4, scoped, tag = 'scoped memory for tpu_custom_call.1']
    #allocation6 [shape = 'u8[262144]{0}', space=vmem, size = 0x40000, scoped, tag = 'input window, operand 1, single buffered']
    #allocation7 [shape = 's32[1]{0}', space=sflag, size = 0x4, scoped, tag = 'scoped memory for tpu_custom_call.1']
    #allocation8 [shape = 'u8[131072]{0}', space=vmem, size = 0x20000, scoped, tag = 'input window, operand 2, single buffered']
    #allocation9 [shape = 'u8[4096]{0}', space=vmem, size = 0x1000, scoped, tag = 'output window, operand 0, single buffered']
    %8 = vsyncpa [#allocation4], 0
    %9 = vsyncpa [#allocation7], 0
    %10 = vsyncpa [#allocation5], 0
    // Predicated region
    $region2: #{tpu_custom_call.1} parent=1 // pred_check
      _
    $region3: #{tpu_custom_call.1} parent=1 // pred_check_branch
      %12 = sbr.rel (0) target = $region5
    $region4: #{tpu_custom_call.1} parent=1 // pred_region
      %s14 = ssub.s32 128, 128
      %15 = vsyncadd [#allocation4], %s14
      %s16 = sshll.u32 [#allocation3], 4
      %s17 = int_to_ptr.vmem [resolvable:$true] %s16
      %22 = dma.hbm_to_vmem [thread:$0]  %s0, 128, %s17, [#allocation4], 64, 64, 4
    $region5: #{tpu_custom_call.1} parent=1 // pred_fallthru
      _
    // Predicated region
    $region6: #{tpu_custom_call.1} parent=1 // pred_check
      _
    $region7: #{tpu_custom_call.1} parent=1 // pred_check_branch
      %24 = sbr.rel (0) target = $region9
    $region8: #{tpu_custom_call.1} parent=1 // pred_region
      %s25 = sadd.s32 0, 0
      %s27 = ssub.s32 8192, 8192
      %28 = vsyncadd [#allocation7], %s27
      %s29 = smul.addr %s25, 128
      %s30 = smul.addr %s29, 64
      %s31 = scalar_lea.hbm %s1, %s30
      %s32 = sshll.u32 [#allocation6], 4
      %s33 = int_to_ptr.vmem [resolvable:$true] %s32
      %38 = dma.hbm_to_vmem [thread:$0]  %s31, 8192, %s33, [#allocation7], 512, 512, 32
    $region9: #{tpu_custom_call.1} parent=1 // pred_fallthru
      _
    // Predicated region
    $region10: #{tpu_custom_call.1} parent=1 // pred_check
      _
    $region11: #{tpu_custom_call.1} parent=1 // pred_check_branch
      %40 = sbr.rel (0) target = $region13
    $region12: #{tpu_custom_call.1} parent=1 // pred_region
      %s41 = sadd.s32 0, 0
      %s43 = ssub.s32 4096, 4096
      %44 = vsyncadd [#allocation7], %s43
      %s45 = smul.addr %s41, 64
      %s46 = smul.addr %s45, 64
      %s47 = scalar_lea.hbm %s2, %s46
      %s48 = sshll.u32 [#allocation8], 4
      %s49 = int_to_ptr.vmem [resolvable:$true] %s48
      %54 = dma.hbm_to_vmem [thread:$0]  %s47, 4096, %s49, [#allocation7], 64, 64, 4
    $region13: #{tpu_custom_call.1} parent=1 // pred_fallthru
      _
    // Predicated region
    $region14: #{tpu_custom_call.1} parent=1 // pred_check
      _
    $region15: #{tpu_custom_call.1} parent=1 // pred_check_branch
      %56 = sbr.rel (0) target = $region17
    $region16: #{tpu_custom_call.1} parent=1 // pred_region
      %57 = dma.done [#allocation4], 128
    $region17: #{tpu_custom_call.1} parent=1 // pred_fallthru
      _
    // Predicated region
    $region18: #{tpu_custom_call.1} parent=1 // pred_check
      _
    $region19: #{tpu_custom_call.1} parent=1 // pred_check_branch
      %59 = sbr.rel (0) target = $region21
    $region20: #{tpu_custom_call.1} parent=1 // pred_region
      %60 = dma.done [#allocation7], 8192
    $region21: #{tpu_custom_call.1} parent=1 // pred_fallthru
      _
    // Predicated region
    $region22: #{tpu_custom_call.1} parent=1 // pred_check
      _
    $region23: #{tpu_custom_call.1} parent=1 // pred_check_branch
      %62 = sbr.rel (0) target = $region25
    $region24: #{tpu_custom_call.1} parent=1 // pred_region
      %63 = dma.done [#allocation7], 4096
    $region25: #{tpu_custom_call.1} parent=1 // pred_fallthru
      _
    %s64 = sadd.s32 0, 0
    %s65 = sadd.s32 0, 0
    %v67 = vld [vmem:[#allocation3] sm:$0xf]
    %v68 = vld [vmem:[#allocation3 + $0x4] sm:$0xf]
    %v69 = vld [vmem:[#allocation6] sm:$0xff]
    %v70 = vld [vmem:[#allocation6 + $0x8] sm:$0xff]
    %v71 = vld [vmem:[#allocation6 + $0x10] sm:$0xff]
    %v72 = vld [vmem:[#allocation6 + $0x18] sm:$0xff]
    %v73 = vld [vmem:[#allocation6 + $0x20] sm:$0xff]
    %v74 = vld [vmem:[#allocation6 + $0x28] sm:$0xff]
    %v75 = vld [vmem:[#allocation6 + $0x30] sm:$0xff]
    %v76 = vld [vmem:[#allocation6 + $0x38] sm:$0xff]
    %v77 = vld [vmem:[#allocation6 + $0x40] sm:$0xff]
    %v78 = vld [vmem:[#allocation6 + $0x48] sm:$0xff]
    %v79 = vld [vmem:[#allocation6 + $0x50] sm:$0xff]
    %v80 = vld [vmem:[#allocation6 + $0x58] sm:$0xff]
    %v81 = vld [vmem:[#allocation6 + $0x60] sm:$0xff]
    %v82 = vld [vmem:[#allocation6 + $0x68] sm:$0xff]
    %v83 = vld [vmem:[#allocation6 + $0x70] sm:$0xff]
    %v84 = vld [vmem:[#allocation6 + $0x78] sm:$0xff]
    %v85 = vld [vmem:[#allocation6 + $0x80] sm:$0xff]
    %v86 = vld [vmem:[#allocation6 + $0x88] sm:$0xff]
    %v87 = vld [vmem:[#allocation6 + $0x90] sm:$0xff]
    %v88 = vld [vmem:[#allocation6 + $0x98] sm:$0xff]
    %v89 = vld [vmem:[#allocation6 + $0xa0] sm:$0xff]
    %v90 = vld [vmem:[#allocation6 + $0xa8] sm:$0xff]
    %v91 = vld [vmem:[#allocation6 + $0xb0] sm:$0xff]
    %v92 = vld [vmem:[#allocation6 + $0xb8] sm:$0xff]
    %v93 = vld [vmem:[#allocation6 + $0xc0] sm:$0xff]
    %v94 = vld [vmem:[#allocation6 + $0xc8] sm:$0xff]
    %v95 = vld [vmem:[#allocation6 + $0xd0] sm:$0xff]
    %v96 = vld [vmem:[#allocation6 + $0xd8] sm:$0xff]
    %v97 = vld [vmem:[#allocation6 + $0xe0] sm:$0xff]
    %v98 = vld [vmem:[#allocation6 + $0xe8] sm:$0xff]
    %v99 = vld [vmem:[#allocation6 + $0xf0] sm:$0xff]
    %v100 = vld [vmem:[#allocation6 + $0xf8] sm:$0xff]
    %v101 = vld [vmem:[#allocation6 + $0x100] sm:$0xff]
    %v102 = vld [vmem:[#allocation6 + $0x108] sm:$0xff]
    %v103 = vld [vmem:[#allocation6 + $0x110] sm:$0xff]
    %v104 = vld [vmem:[#allocation6 + $0x118] sm:$0xff]
    %v105 = vld [vmem:[#allocation6 + $0x120] sm:$0xff]
    %v106 = vld [vmem:[#allocation6 + $0x128] sm:$0xff]
    %v107 = vld [vmem:[#allocation6 + $0x130] sm:$0xff]
    %v108 = vld [vmem:[#allocation6 + $0x138] sm:$0xff]
    %v109 = vld [vmem:[#allocation6 + $0x140] sm:$0xff]
    %v110 = vld [vmem:[#allocation6 + $0x148] sm:$0xff]
    %v111 = vld [vmem:[#allocation6 + $0x150] sm:$0xff]
    %v112 = vld [vmem:[#allocation6 + $0x158] sm:$0xff]
    %v113 = vld [vmem:[#allocation6 + $0x160] sm:$0xff]
    %v114 = vld [vmem:[#allocation6 + $0x168] sm:$0xff]
    %v115 = vld [vmem:[#allocation6 + $0x170] sm:$0xff]
    %v116 = vld [vmem:[#allocation6 + $0x178] sm:$0xff]
    %v117 = vld [vmem:[#allocation6 + $0x180] sm:$0xff]
    %v118 = vld [vmem:[#allocation6 + $0x188] sm:$0xff]
    %v119 = vld [vmem:[#allocation6 + $0x190] sm:$0xff]
    %v120 = vld [vmem:[#allocation6 + $0x198] sm:$0xff]
    %v121 = vld [vmem:[#allocation6 + $0x1a0] sm:$0xff]
    %v122 = vld [vmem:[#allocation6 + $0x1a8] sm:$0xff]
    %v123 = vld [vmem:[#allocation6 + $0x1b0] sm:$0xff]
    %v124 = vld [vmem:[#allocation6 + $0x1b8] sm:$0xff]
    %v125 = vld [vmem:[#allocation6 + $0x1c0] sm:$0xff]
    %v126 = vld [vmem:[#allocation6 + $0x1c8] sm:$0xff]
    %v127 = vld [vmem:[#allocation6 + $0x1d0] sm:$0xff]
    %v128 = vld [vmem:[#allocation6 + $0x1d8] sm:$0xff]
    %v129 = vld [vmem:[#allocation6 + $0x1e0] sm:$0xff]
    %v130 = vld [vmem:[#allocation6 + $0x1e8] sm:$0xff]
    %v131 = vld [vmem:[#allocation6 + $0x1f0] sm:$0xff]
    %v132 = vld [vmem:[#allocation6 + $0x1f8] sm:$0xff]
    %v135 = vunpack.c.l.b16 %v67
    %v136 = vunpack.c.l.b16 %v68
    %v137 = vpack.c.b16 %v136, %v135
    %v203 = vunpack.c.l.b16 %v69
    %v204 = vunpack.c.h.b16 %v69
    %v205 = vunpack.c.l.b16 %v70
    %v206 = vunpack.c.h.b16 %v70
    %v207 = vunpack.c.l.b16 %v71
    %v208 = vunpack.c.h.b16 %v71
    %v209 = vunpack.c.l.b16 %v72
    %v210 = vunpack.c.h.b16 %v72
    %v211 = vunpack.c.l.b16 %v73
    %v212 = vunpack.c.h.b16 %v73
    %v213 = vunpack.c.l.b16 %v74
    %v214 = vunpack.c.h.b16 %v74
    %v215 = vunpack.c.l.b16 %v75
    %v216 = vunpack.c.h.b16 %v75
    %v217 = vunpack.c.l.b16 %v76
    %v218 = vunpack.c.h.b16 %v76
    %v219 = vunpack.c.l.b16 %v77
    %v220 = vunpack.c.h.b16 %v77
    %v221 = vunpack.c.l.b16 %v78
    %v222 = vunpack.c.h.b16 %v78
    %v223 = vunpack.c.l.b16 %v79
    %v224 = vunpack.c.h.b16 %v79
    %v225 = vunpack.c.l.b16 %v80
    %v226 = vunpack.c.h.b16 %v80
    %v227 = vunpack.c.l.b16 %v81
    %v228 = vunpack.c.h.b16 %v81
    %v229 = vunpack.c.l.b16 %v82
    %v230 = vunpack.c.h.b16 %v82
    %v231 = vunpack.c.l.b16 %v83
    %v232 = vunpack.c.h.b16 %v83
    %v233 = vunpack.c.l.b16 %v84
    %v234 = vunpack.c.h.b16 %v84
    %v235 = vunpack.c.l.b16 %v85
    %v236 = vunpack.c.h.b16 %v85
    %v237 = vunpack.c.l.b16 %v86
    %v238 = vunpack.c.h.b16 %v86
    %v239 = vunpack.c.l.b16 %v87
    %v240 = vunpack.c.h.b16 %v87
    %v241 = vunpack.c.l.b16 %v88
    %v242 = vunpack.c.h.b16 %v88
    %v243 = vunpack.c.l.b16 %v89
    %v244 = vunpack.c.h.b16 %v89
    %v245 = vunpack.c.l.b16 %v90
    %v246 = vunpack.c.h.b16 %v90
    %v247 = vunpack.c.l.b16 %v91
    %v248 = vunpack.c.h.b16 %v91
    %v249 = vunpack.c.l.b16 %v92
    %v250 = vunpack.c.h.b16 %v92
    %v251 = vunpack.c.l.b16 %v93
    %v252 = vunpack.c.h.b16 %v93
    %v253 = vunpack.c.l.b16 %v94
    %v254 = vunpack.c.h.b16 %v94
    %v255 = vunpack.c.l.b16 %v95
    %v256 = vunpack.c.h.b16 %v95
    %v257 = vunpack.c.l.b16 %v96
    %v258 = vunpack.c.h.b16 %v96
    %v259 = vunpack.c.l.b16 %v97
    %v260 = vunpack.c.h.b16 %v97
    %v261 = vunpack.c.l.b16 %v98
    %v262 = vunpack.c.h.b16 %v98
    %v263 = vunpack.c.l.b16 %v99
    %v264 = vunpack.c.h.b16 %v99
    %v265 = vunpack.c.l.b16 %v100
    %v266 = vunpack.c.h.b16 %v100
    %v267 = vunpack.c.l.b16 %v101
    %v268 = vunpack.c.h.b16 %v101
    %v269 = vunpack.c.l.b16 %v102
    %v270 = vunpack.c.h.b16 %v102
    %v271 = vunpack.c.l.b16 %v103
    %v272 = vunpack.c.h.b16 %v103
    %v273 = vunpack.c.l.b16 %v104
    %v274 = vunpack.c.h.b16 %v104
    %v275 = vunpack.c.l.b16 %v105
    %v276 = vunpack.c.h.b16 %v105
    %v277 = vunpack.c.l.b16 %v106
    %v278 = vunpack.c.h.b16 %v106
    %v279 = vunpack.c.l.b16 %v107
    %v280 = vunpack.c.h.b16 %v107
    %v281 = vunpack.c.l.b16 %v108
    %v282 = vunpack.c.h.b16 %v108
    %v283 = vunpack.c.l.b16 %v109
    %v284 = vunpack.c.h.b16 %v109
    %v285 = vunpack.c.l.b16 %v110
    %v286 = vunpack.c.h.b16 %v110
    %v287 = vunpack.c.l.b16 %v111
    %v288 = vunpack.c.h.b16 %v111
    %v289 = vunpack.c.l.b16 %v112
    %v290 = vunpack.c.h.b16 %v112
    %v291 = vunpack.c.l.b16 %v113
    %v292 = vunpack.c.h.b16 %v113
    %v293 = vunpack.c.l.b16 %v114
    %v294 = vunpack.c.h.b16 %v114
    %v295 = vunpack.c.l.b16 %v115
    %v296 = vunpack.c.h.b16 %v115
    %v297 = vunpack.c.l.b16 %v116
    %v298 = vunpack.c.h.b16 %v116
    %v299 = vunpack.c.l.b16 %v117
    %v300 = vunpack.c.h.b16 %v117
    %v301 = vunpack.c.l.b16 %v118
    %v302 = vunpack.c.h.b16 %v118
    %v303 = vunpack.c.l.b16 %v119
    %v304 = vunpack.c.h.b16 %v119
    %v305 = vunpack.c.l.b16 %v120
    %v306 = vunpack.c.h.b16 %v120
    %v307 = vunpack.c.l.b16 %v121
    %v308 = vunpack.c.h.b16 %v121
    %v309 = vunpack.c.l.b16 %v122
    %v310 = vunpack.c.h.b16 %v122
    %v311 = vunpack.c.l.b16 %v123
    %v312 = vunpack.c.h.b16 %v123
    %v313 = vunpack.c.l.b16 %v124
    %v314 = vunpack.c.h.b16 %v124
    %v315 = vunpack.c.l.b16 %v125
    %v316 = vunpack.c.h.b16 %v125
    %v317 = vunpack.c.l.b16 %v126
    %v318 = vunpack.c.h.b16 %v126
    %v319 = vunpack.c.l.b16 %v127
    %v320 = vunpack.c.h.b16 %v127
    %v321 = vunpack.c.l.b16 %v128
    %v322 = vunpack.c.h.b16 %v128
    %v323 = vunpack.c.l.b16 %v129
    %v324 = vunpack.c.h.b16 %v129
    %v325 = vunpack.c.l.b16 %v130
    %v326 = vunpack.c.h.b16 %v130
    %v327 = vunpack.c.l.b16 %v131
    %v328 = vunpack.c.h.b16 %v131
    %v329 = vunpack.c.l.b16 %v132
    %v330 = vunpack.c.h.b16 %v132
    %v331 = vpack.c.b16 %v211, %v203
    %v332 = vpack.c.b16 %v212, %v204
    %v333 = vpack.c.b16 %v213, %v205
    %v334 = vpack.c.b16 %v214, %v206
    %v335 = vpack.c.b16 %v215, %v207
    %v336 = vpack.c.b16 %v216, %v208
    %v337 = vpack.c.b16 %v217, %v209
    %v338 = vpack.c.b16 %v218, %v210
    %v339 = vpack.c.b16 %v227, %v219
    %v340 = vpack.c.b16 %v228, %v220
    %v341 = vpack.c.b16 %v229, %v221
    %v342 = vpack.c.b16 %v230, %v222
    %v343 = vpack.c.b16 %v231, %v223
    %v344 = vpack.c.b16 %v232, %v224
    %v345 = vpack.c.b16 %v233, %v225
    %v346 = vpack.c.b16 %v234, %v226
    %v347 = vpack.c.b16 %v243, %v235
    %v348 = vpack.c.b16 %v244, %v236
    %v349 = vpack.c.b16 %v245, %v237
    %v350 = vpack.c.b16 %v246, %v238
    %v351 = vpack.c.b16 %v247, %v239
    %v352 = vpack.c.b16 %v248, %v240
    %v353 = vpack.c.b16 %v249, %v241
    %v354 = vpack.c.b16 %v250, %v242
    %v355 = vpack.c.b16 %v259, %v251
    %v356 = vpack.c.b16 %v260, %v252
    %v357 = vpack.c.b16 %v261, %v253
    %v358 = vpack.c.b16 %v262, %v254
    %v359 = vpack.c.b16 %v263, %v255
    %v360 = vpack.c.b16 %v264, %v256
    %v361 = vpack.c.b16 %v265, %v257
    %v362 = vpack.c.b16 %v266, %v258
    %v363 = vpack.c.b16 %v275, %v267
    %v364 = vpack.c.b16 %v276, %v268
    %v365 = vpack.c.b16 %v277, %v269
    %v366 = vpack.c.b16 %v278, %v270
    %v367 = vpack.c.b16 %v279, %v271
    %v368 = vpack.c.b16 %v280, %v272
    %v369 = vpack.c.b16 %v281, %v273
    %v370 = vpack.c.b16 %v282, %v274
    %v371 = vpack.c.b16 %v291, %v283
    %v372 = vpack.c.b16 %v292, %v284
    %v373 = vpack.c.b16 %v293, %v285
    %v374 = vpack.c.b16 %v294, %v286
    %v375 = vpack.c.b16 %v295, %v287
    %v376 = vpack.c.b16 %v296, %v288
    %v377 = vpack.c.b16 %v297, %v289
    %v378 = vpack.c.b16 %v298, %v290
    %v379 = vpack.c.b16 %v307, %v299
    %v380 = vpack.c.b16 %v308, %v300
    %v381 = vpack.c.b16 %v309, %v301
    %v382 = vpack.c.b16 %v310, %v302
    %v383 = vpack.c.b16 %v311, %v303
    %v384 = vpack.c.b16 %v312, %v304
    %v385 = vpack.c.b16 %v313, %v305
    %v386 = vpack.c.b16 %v314, %v306
    %v387 = vpack.c.b16 %v323, %v315
    %v388 = vpack.c.b16 %v324, %v316
    %v389 = vpack.c.b16 %v325, %v317
    %v390 = vpack.c.b16 %v326, %v318
    %v391 = vpack.c.b16 %v327, %v319
    %v392 = vpack.c.b16 %v328, %v320
    %v393 = vpack.c.b16 %v329, %v321
    %v394 = vpack.c.b16 %v330, %v322
    %459 = vmatprep.subr.bf16.mxu0 %v332
    %460 = vmatpush1.bf16.msra.mxu0 %v331
    %461 = vmatprep.subr.bf16.mxu0 %v340
    %462 = vmatpush1.bf16.msra.mxu0 %v339
    %463 = vmatprep.subr.bf16.mxu0 %v348
    %464 = vmatpush1.bf16.msra.mxu0 %v347
    %465 = vmatprep.subr.bf16.mxu0 %v356
    %466 = vmatpush1.bf16.msra.mxu0 %v355
    %467 = vmatprep.subr.bf16.mxu0 %v364
    %468 = vmatpush1.bf16.msra.mxu0 %v363
    %469 = vmatprep.subr.bf16.mxu0 %v372
    %470 = vmatpush1.bf16.msra.mxu0 %v371
    %471 = vmatprep.subr.bf16.mxu0 %v380
    %472 = vmatpush1.bf16.msra.mxu0 %v379
    %473 = vmatprep.subr.bf16.mxu0 %v388
    %474 = vmatpush1.bf16.msra.mxu0 %v387
    %475 = vmatprep.subr.bf16.mxu0 0
    %476 = vmatpush1.bf16.msra.mxu0 0
    %477 = vmatprep.subr.bf16.mxu0 0
    %478 = vmatpush1.bf16.msra.mxu0 0
    %479 = vmatprep.subr.bf16.mxu0 0
    %480 = vmatpush1.bf16.msra.mxu0 0
    %481 = vmatprep.subr.bf16.mxu0 0
    %482 = vmatpush1.bf16.msra.mxu0 0
    %483 = vmatprep.subr.bf16.mxu0 0
    %484 = vmatpush1.bf16.msra.mxu0 0
    %485 = vmatprep.subr.bf16.mxu0 0
    %486 = vmatpush1.bf16.msra.mxu0 0
    %487 = vmatprep.subr.bf16.mxu0 0
    %488 = vmatpush1.bf16.msra.mxu0 0
    %489 = vmatprep.subr.bf16.mxu0 0
    %490 = vmatpush1.bf16.msra.mxu0 0
    %491 = vmatprep.mubr.bf16.mxu0 0
    %492 = vmatmul.mubr.bf16.gmra.mrb[0].mxu0 %v137
    %v493 = vpop.f32.mrb[0].mxu0
    %v494 = vadd.f32 0.0, %v493
    %v495 = vpop.f32.mrb[0].mxu0
    %v496 = vadd.f32 0.0, %v495
    %v497 = vpop.f32.mrb[0].mxu0
    %v498 = vadd.f32 0.0, %v497
    %v499 = vpop.f32.mrb[0].mxu0
    %v500 = vadd.f32 0.0, %v499
    %501 = vdwg.mxu0
    %502 = vmatprep.subr.bf16.mxu0 %v334
    %503 = vmatpush1.bf16.msra.mxu0 %v333
    %504 = vmatprep.subr.bf16.mxu0 %v342
    %505 = vmatpush1.bf16.msra.mxu0 %v341
    %506 = vmatprep.subr.bf16.mxu0 %v350
    %507 = vmatpush1.bf16.msra.mxu0 %v349
    %508 = vmatprep.subr.bf16.mxu0 %v358
    %509 = vmatpush1.bf16.msra.mxu0 %v357
    %510 = vmatprep.subr.bf16.mxu0 %v366
    %511 = vmatpush1.bf16.msra.mxu0 %v365
    %512 = vmatprep.subr.bf16.mxu0 %v374
    %513 = vmatpush1.bf16.msra.mxu0 %v373
    %514 = vmatprep.subr.bf16.mxu0 %v382
    %515 = vmatpush1.bf16.msra.mxu0 %v381
    %516 = vmatprep.subr.bf16.mxu0 %v390
    %517 = vmatpush1.bf16.msra.mxu0 %v389
    %518 = vmatprep.subr.bf16.mxu0 0
    %519 = vmatpush1.bf16.msra.mxu0 0
    %520 = vmatprep.subr.bf16.mxu0 0
    %521 = vmatpush1.bf16.msra.mxu0 0
    %522 = vmatprep.subr.bf16.mxu0 0
    %523 = vmatpush1.bf16.msra.mxu0 0
    %524 = vmatprep.subr.bf16.mxu0 0
    %525 = vmatpush1.bf16.msra.mxu0 0
    %526 = vmatprep.subr.bf16.mxu0 0
    %527 = vmatpush1.bf16.msra.mxu0 0
    %528 = vmatprep.subr.bf16.mxu0 0
    %529 = vmatpush1.bf16.msra.mxu0 0
    %530 = vmatprep.subr.bf16.mxu0 0
    %531 = vmatpush1.bf16.msra.mxu0 0
    %532 = vmatprep.subr.bf16.mxu0 0
    %533 = vmatpush1.bf16.msra.mxu0 0
    %534 = vmatprep.mubr.bf16.mxu0 0
    %535 = vmatmul.mubr.bf16.gmra.mrb[0].mxu0 %v137
    %v536 = vpop.f32.mrb[0].mxu0
    %v537 = vadd.f32 0.0, %v536
    %v538 = vpop.f32.mrb[0].mxu0
    %v539 = vadd.f32 0.0, %v538
    %v540 = vpop.f32.mrb[0].mxu0
    %v541 = vadd.f32 0.0, %v540
    %v542 = vpop.f32.mrb[0].mxu0
    %v543 = vadd.f32 0.0, %v542
    %544 = vdwg.mxu0
    %545 = vmatprep.subr.bf16.mxu0 %v336
    %546 = vmatpush1.bf16.msra.mxu0 %v335
    %547 = vmatprep.subr.bf16.mxu0 %v344
    %548 = vmatpush1.bf16.msra.mxu0 %v343
    %549 = vmatprep.subr.bf16.mxu0 %v352
    %550 = vmatpush1.bf16.msra.mxu0 %v351
    %551 = vmatprep.subr.bf16.mxu0 %v360
    %552 = vmatpush1.bf16.msra.mxu0 %v359
    %553 = vmatprep.subr.bf16.mxu0 %v368
    %554 = vmatpush1.bf16.msra.mxu0 %v367
    %555 = vmatprep.subr.bf16.mxu0 %v376
    %556 = vmatpush1.bf16.msra.mxu0 %v375
    %557 = vmatprep.subr.bf16.mxu0 %v384
    %558 = vmatpush1.bf16.msra.mxu0 %v383
    %559 = vmatprep.subr.bf16.mxu0 %v392
    %560 = vmatpush1.bf16.msra.mxu0 %v391
    %561 = vmatprep.subr.bf16.mxu0 0
    %562 = vmatpush1.bf16.msra.mxu0 0
    %563 = vmatprep.subr.bf16.mxu0 0
    %564 = vmatpush1.bf16.msra.mxu0 0
    %565 = vmatprep.subr.bf16.mxu0 0
    %566 = vmatpush1.bf16.msra.mxu0 0
    %567 = vmatprep.subr.bf16.mxu0 0
    %568 = vmatpush1.bf16.msra.mxu0 0
    %569 = vmatprep.subr.bf16.mxu0 0
    %570 = vmatpush1.bf16.msra.mxu0 0
    %571 = vmatprep.subr.bf16.mxu0 0
    %572 = vmatpush1.bf16.msra.mxu0 0
    %573 = vmatprep.subr.bf16.mxu0 0
    %574 = vmatpush1.bf16.msra.mxu0 0
    %575 = vmatprep.subr.bf16.mxu0 0
    %576 = vmatpush1.bf16.msra.mxu0 0
    %577 = vmatprep.mubr.bf16.mxu0 0
    %578 = vmatmul.mubr.bf16.gmra.mrb[0].mxu0 %v137
    %v579 = vpop.f32.mrb[0].mxu0
    %v580 = vadd.f32 0.0, %v579
    %v581 = vpop.f32.mrb[0].mxu0
    %v582 = vadd.f32 0.0, %v581
    %v583 = vpop.f32.mrb[0].mxu0
    %v584 = vadd.f32 0.0, %v583
    %v585 = vpop.f32.mrb[0].mxu0
    %v586 = vadd.f32 0.0, %v585
    %587 = vdwg.mxu0
    %588 = vmatprep.subr.bf16.mxu0 %v338
    %589 = vmatpush1.bf16.msra.mxu0 %v337
    %590 = vmatprep.subr.bf16.mxu0 %v346
    %591 = vmatpush1.bf16.msra.mxu0 %v345
    %592 = vmatprep.subr.bf16.mxu0 %v354
    %593 = vmatpush1.bf16.msra.mxu0 %v353
    %594 = vmatprep.subr.bf16.mxu0 %v362
    %595 = vmatpush1.bf16.msra.mxu0 %v361
    %596 = vmatprep.subr.bf16.mxu0 %v370
    %597 = vmatpush1.bf16.msra.mxu0 %v369
    %598 = vmatprep.subr.bf16.mxu0 %v378
    %599 = vmatpush1.bf16.msra.mxu0 %v377
    %600 = vmatprep.subr.bf16.mxu0 %v386
    %601 = vmatpush1.bf16.msra.mxu0 %v385
    %602 = vmatprep.subr.bf16.mxu0 %v394
    %603 = vmatpush1.bf16.msra.mxu0 %v393
    %604 = vmatprep.subr.bf16.mxu0 0
    %605 = vmatpush1.bf16.msra.mxu0 0
    %606 = vmatprep.subr.bf16.mxu0 0
    %607 = vmatpush1.bf16.msra.mxu0 0
    %608 = vmatprep.subr.bf16.mxu0 0
    %609 = vmatpush1.bf16.msra.mxu0 0
    %610 = vmatprep.subr.bf16.mxu0 0
    %611 = vmatpush1.bf16.msra.mxu0 0
    %612 = vmatprep.subr.bf16.mxu0 0
    %613 = vmatpush1.bf16.msra.mxu0 0
    %614 = vmatprep.subr.bf16.mxu0 0
    %615 = vmatpush1.bf16.msra.mxu0 0
    %616 = vmatprep.subr.bf16.mxu0 0
    %617 = vmatpush1.bf16.msra.mxu0 0
    %618 = vmatprep.subr.bf16.mxu0 0
    %619 = vmatpush1.bf16.msra.mxu0 0
    %620 = vmatprep.mubr.bf16.mxu0 0
    %621 = vmatmul.mubr.bf16.gmra.mrb[0].mxu0 %v137
    %v622 = vpop.f32.mrb[0].mxu0
    %v623 = vadd.f32 0.0, %v622
    %v624 = vpop.f32.mrb[0].mxu0
    %v625 = vadd.f32 0.0, %v624
    %v626 = vpop.f32.mrb[0].mxu0
    %v627 = vadd.f32 0.0, %v626
    %v628 = vpop.f32.mrb[0].mxu0
    %v629 = vadd.f32 0.0, %v628
    %630 = vdwg.mxu0
    %v631 = vxor.u32 %v494, 2147483648
    %v632 = vxor.u32 %v496, 2147483648
    %v633 = vxor.u32 %v537, 2147483648
    %v634 = vxor.u32 %v539, 2147483648
    %v635 = vxor.u32 %v498, 2147483648
    %v636 = vxor.u32 %v500, 2147483648
    %v637 = vxor.u32 %v541, 2147483648
    %v638 = vxor.u32 %v543, 2147483648
    %v639 = vmul.f32 %v631, 1.442695
    %v640 = vpow.pop %v639
    %v641 = vmul.f32 %v632, 1.442695
    %v642 = vpow.pop %v641
    %v643 = vmul.f32 %v633, 1.442695
    %v644 = vpow.pop %v643
    %v645 = vmul.f32 %v634, 1.442695
    %v646 = vpow.pop %v645
    %v647 = vmul.f32 %v635, 1.442695
    %v648 = vpow.pop %v647
    %v649 = vmul.f32 %v636, 1.442695
    %v650 = vpow.pop %v649
    %v651 = vmul.f32 %v637, 1.442695
    %v652 = vpow.pop %v651
    %v653 = vmul.f32 %v638, 1.442695
    %v654 = vpow.pop %v653
    %v655 = vadd.f32 %v640, 1.0
    %v656 = vadd.f32 %v642, 1.0
    %v657 = vadd.f32 %v644, 1.0
    %v658 = vadd.f32 %v646, 1.0
    %v659 = vadd.f32 %v648, 1.0
    %v660 = vadd.f32 %v650, 1.0
    %v661 = vadd.f32 %v652, 1.0
    %v662 = vadd.f32 %v654, 1.0
    %v663 = vrcp.pop %v655
    %v664 = vmul.f32 1.0, %v663
    %v665 = vrcp.pop %v656
    %v666 = vmul.f32 1.0, %v665
    %v667 = vrcp.pop %v657
    %v668 = vmul.f32 1.0, %v667
    %v669 = vrcp.pop %v658
    %v670 = vmul.f32 1.0, %v669
    %v671 = vrcp.pop %v659
    %v672 = vmul.f32 1.0, %v671
    %v673 = vrcp.pop %v660
    %v674 = vmul.f32 1.0, %v673
    %v675 = vrcp.pop %v661
    %v676 = vmul.f32 1.0, %v675
    %v677 = vrcp.pop %v662
    %v678 = vmul.f32 1.0, %v677
    %v679 = vmul.f32 %v494, %v664
    %v680 = vmul.f32 %v496, %v666
    %v681 = vmul.f32 %v537, %v668
    %v682 = vmul.f32 %v539, %v670
    %v683 = vmul.f32 %v498, %v672
    %v684 = vmul.f32 %v500, %v674
    %v685 = vmul.f32 %v541, %v676
    %v686 = vmul.f32 %v543, %v678
    %v687 = vmul.f32 %v679, %v580
    %v688 = vmul.f32 %v680, %v582
    %v689 = vmul.f32 %v681, %v623
    %v690 = vmul.f32 %v682, %v625
    %v691 = vmul.f32 %v683, %v584
    %v692 = vmul.f32 %v684, %v586
    %v693 = vmul.f32 %v685, %v627
    %v694 = vmul.f32 %v686, %v629
    %v695 = vpack.c.bf16 %v691, %v687
    %v696 = vpack.c.bf16 %v692, %v688
    %v697 = vpack.c.bf16 %v693, %v689
    %v698 = vpack.c.bf16 %v694, %v690
    %v699 = vld [vmem:[#allocation8] sm:$0xf]
    %v700 = vld [vmem:[#allocation8 + $0x4] sm:$0xf]
    %v701 = vld [vmem:[#allocation8 + $0x8] sm:$0xf]
    %v702 = vld [vmem:[#allocation8 + $0xc] sm:$0xf]
    %v703 = vld [vmem:[#allocation8 + $0x10] sm:$0xf]
    %v704 = vld [vmem:[#allocation8 + $0x14] sm:$0xf]
    %v705 = vld [vmem:[#allocation8 + $0x18] sm:$0xf]
    %v706 = vld [vmem:[#allocation8 + $0x1c] sm:$0xf]
    %v707 = vld [vmem:[#allocation8 + $0x20] sm:$0xf]
    %v708 = vld [vmem:[#allocation8 + $0x24] sm:$0xf]
    %v709 = vld [vmem:[#allocation8 + $0x28] sm:$0xf]
    %v710 = vld [vmem:[#allocation8 + $0x2c] sm:$0xf]
    %v711 = vld [vmem:[#allocation8 + $0x30] sm:$0xf]
    %v712 = vld [vmem:[#allocation8 + $0x34] sm:$0xf]
    %v713 = vld [vmem:[#allocation8 + $0x38] sm:$0xf]
    %v714 = vld [vmem:[#allocation8 + $0x3c] sm:$0xf]
    %v715 = vld [vmem:[#allocation8 + $0x40] sm:$0xf]
    %v716 = vld [vmem:[#allocation8 + $0x44] sm:$0xf]
    %v717 = vld [vmem:[#allocation8 + $0x48] sm:$0xf]
    %v718 = vld [vmem:[#allocation8 + $0x4c] sm:$0xf]
    %v719 = vld [vmem:[#allocation8 + $0x50] sm:$0xf]
    %v720 = vld [vmem:[#allocation8 + $0x54] sm:$0xf]
    %v721 = vld [vmem:[#allocation8 + $0x58] sm:$0xf]
    %v722 = vld [vmem:[#allocation8 + $0x5c] sm:$0xf]
    %v723 = vld [vmem:[#allocation8 + $0x60] sm:$0xf]
    %v724 = vld [vmem:[#allocation8 + $0x64] sm:$0xf]
    %v725 = vld [vmem:[#allocation8 + $0x68] sm:$0xf]
    %v726 = vld [vmem:[#allocation8 + $0x6c] sm:$0xf]
    %v727 = vld [vmem:[#allocation8 + $0x70] sm:$0xf]
    %v728 = vld [vmem:[#allocation8 + $0x74] sm:$0xf]
    %v729 = vld [vmem:[#allocation8 + $0x78] sm:$0xf]
    %v730 = vld [vmem:[#allocation8 + $0x7c] sm:$0xf]
    %v731 = vld [vmem:[#allocation8 + $0x80] sm:$0xf]
    %v732 = vld [vmem:[#allocation8 + $0x84] sm:$0xf]
    %v733 = vld [vmem:[#allocation8 + $0x88] sm:$0xf]
    %v734 = vld [vmem:[#allocation8 + $0x8c] sm:$0xf]
    %v735 = vld [vmem:[#allocation8 + $0x90] sm:$0xf]
    %v736 = vld [vmem:[#allocation8 + $0x94] sm:$0xf]
    %v737 = vld [vmem:[#allocation8 + $0x98] sm:$0xf]
    %v738 = vld [vmem:[#allocation8 + $0x9c] sm:$0xf]
    %v739 = vld [vmem:[#allocation8 + $0xa0] sm:$0xf]
    %v740 = vld [vmem:[#allocation8 + $0xa4] sm:$0xf]
    %v741 = vld [vmem:[#allocation8 + $0xa8] sm:$0xf]
    %v742 = vld [vmem:[#allocation8 + $0xac] sm:$0xf]
    %v743 = vld [vmem:[#allocation8 + $0xb0] sm:$0xf]
    %v744 = vld [vmem:[#allocation8 + $0xb4] sm:$0xf]
    %v745 = vld [vmem:[#allocation8 + $0xb8] sm:$0xf]
    %v746 = vld [vmem:[#allocation8 + $0xbc] sm:$0xf]
    %v747 = vld [vmem:[#allocation8 + $0xc0] sm:$0xf]
    %v748 = vld [vmem:[#allocation8 + $0xc4] sm:$0xf]
    %v749 = vld [vmem:[#allocation8 + $0xc8] sm:$0xf]
    %v750 = vld [vmem:[#allocation8 + $0xcc] sm:$0xf]
    %v751 = vld [vmem:[#allocation8 + $0xd0] sm:$0xf]
    %v752 = vld [vmem:[#allocation8 + $0xd4] sm:$0xf]
    %v753 = vld [vmem:[#allocation8 + $0xd8] sm:$0xf]
    %v754 = vld [vmem:[#allocation8 + $0xdc] sm:$0xf]
    %v755 = vld [vmem:[#allocation8 + $0xe0] sm:$0xf]
    %v756 = vld [vmem:[#allocation8 + $0xe4] sm:$0xf]
    %v757 = vld [vmem:[#allocation8 + $0xe8] sm:$0xf]
    %v758 = vld [vmem:[#allocation8 + $0xec] sm:$0xf]
    %v759 = vld [vmem:[#allocation8 + $0xf0] sm:$0xf]
    %v760 = vld [vmem:[#allocation8 + $0xf4] sm:$0xf]
    %v761 = vld [vmem:[#allocation8 + $0xf8] sm:$0xf]
    %v762 = vld [vmem:[#allocation8 + $0xfc] sm:$0xf]
    %v827 = vunpack.c.l.b16 %v699
    %v828 = vunpack.c.l.b16 %v700
    %v829 = vunpack.c.l.b16 %v701
    %v830 = vunpack.c.l.b16 %v702
    %v831 = vunpack.c.l.b16 %v703
    %v832 = vunpack.c.l.b16 %v704
    %v833 = vunpack.c.l.b16 %v705
    %v834 = vunpack.c.l.b16 %v706
    %v835 = vunpack.c.l.b16 %v707
    %v836 = vunpack.c.l.b16 %v708
    %v837 = vunpack.c.l.b16 %v709
    %v838 = vunpack.c.l.b16 %v710
    %v839 = vunpack.c.l.b16 %v711
    %v840 = vunpack.c.l.b16 %v712
    %v841 = vunpack.c.l.b16 %v713
    %v842 = vunpack.c.l.b16 %v714
    %v843 = vunpack.c.l.b16 %v715
    %v844 = vunpack.c.l.b16 %v716
    %v845 = vunpack.c.l.b16 %v717
    %v846 = vunpack.c.l.b16 %v718
    %v847 = vunpack.c.l.b16 %v719
    %v848 = vunpack.c.l.b16 %v720
    %v849 = vunpack.c.l.b16 %v721
    %v850 = vunpack.c.l.b16 %v722
    %v851 = vunpack.c.l.b16 %v723
    %v852 = vunpack.c.l.b16 %v724
    %v853 = vunpack.c.l.b16 %v725
    %v854 = vunpack.c.l.b16 %v726
    %v855 = vunpack.c.l.b16 %v727
    %v856 = vunpack.c.l.b16 %v728
    %v857 = vunpack.c.l.b16 %v729
    %v858 = vunpack.c.l.b16 %v730
    %v859 = vunpack.c.l.b16 %v731
    %v860 = vunpack.c.l.b16 %v732
    %v861 = vunpack.c.l.b16 %v733
    %v862 = vunpack.c.l.b16 %v734
    %v863 = vunpack.c.l.b16 %v735
    %v864 = vunpack.c.l.b16 %v736
    %v865 = vunpack.c.l.b16 %v737
    %v866 = vunpack.c.l.b16 %v738
    %v867 = vunpack.c.l.b16 %v739
    %v868 = vunpack.c.l.b16 %v740
    %v869 = vunpack.c.l.b16 %v741
    %v870 = vunpack.c.l.b16 %v742
    %v871 = vunpack.c.l.b16 %v743
    %v872 = vunpack.c.l.b16 %v744
    %v873 = vunpack.c.l.b16 %v745
    %v874 = vunpack.c.l.b16 %v746
    %v875 = vunpack.c.l.b16 %v747
    %v876 = vunpack.c.l.b16 %v748
    %v877 = vunpack.c.l.b16 %v749
    %v878 = vunpack.c.l.b16 %v750
    %v879 = vunpack.c.l.b16 %v751
    %v880 = vunpack.c.l.b16 %v752
    %v881 = vunpack.c.l.b16 %v753
    %v882 = vunpack.c.l.b16 %v754
    %v883 = vunpack.c.l.b16 %v755
    %v884 = vunpack.c.l.b16 %v756
    %v885 = vunpack.c.l.b16 %v757
    %v886 = vunpack.c.l.b16 %v758
    %v887 = vunpack.c.l.b16 %v759
    %v888 = vunpack.c.l.b16 %v760
    %v889 = vunpack.c.l.b16 %v761
    %v890 = vunpack.c.l.b16 %v762
    %v891 = vpack.c.b16 %v828, %v827
    %v892 = vpack.c.b16 %v830, %v829
    %v893 = vpack.c.b16 %v832, %v831
    %v894 = vpack.c.b16 %v834, %v833
    %v895 = vpack.c.b16 %v836, %v835
    %v896 = vpack.c.b16 %v838, %v837
    %v897 = vpack.c.b16 %v840, %v839
    %v898 = vpack.c.b16 %v842, %v841
    %v899 = vpack.c.b16 %v844, %v843
    %v900 = vpack.c.b16 %v846, %v845
    %v901 = vpack.c.b16 %v848, %v847
    %v902 = vpack.c.b16 %v850, %v849
    %v903 = vpack.c.b16 %v852, %v851
    %v904 = vpack.c.b16 %v854, %v853
    %v905 = vpack.c.b16 %v856, %v855
    %v906 = vpack.c.b16 %v858, %v857
    %v907 = vpack.c.b16 %v860, %v859
    %v908 = vpack.c.b16 %v862, %v861
    %v909 = vpack.c.b16 %v864, %v863
    %v910 = vpack.c.b16 %v866, %v865
    %v911 = vpack.c.b16 %v868, %v867
    %v912 = vpack.c.b16 %v870, %v869
    %v913 = vpack.c.b16 %v872, %v871
    %v914 = vpack.c.b16 %v874, %v873
    %v915 = vpack.c.b16 %v876, %v875
    %v916 = vpack.c.b16 %v878, %v877
    %v917 = vpack.c.b16 %v880, %v879
    %v918 = vpack.c.b16 %v882, %v881
    %v919 = vpack.c.b16 %v884, %v883
    %v920 = vpack.c.b16 %v886, %v885
    %v921 = vpack.c.b16 %v888, %v887
    %v922 = vpack.c.b16 %v890, %v889
    %955 = vmatprep.subr.bf16.mxu0 0
    %956 = vmatpush1.bf16.msra.mxu0 %v891
    %957 = vmatprep.subr.bf16.mxu0 0
    %958 = vmatpush1.bf16.msra.mxu0 %v892
    %959 = vmatprep.subr.bf16.mxu0 0
    %960 = vmatpush1.bf16.msra.mxu0 %v893
    %961 = vmatprep.subr.bf16.mxu0 0
    %962 = vmatpush1.bf16.msra.mxu0 %v894
    %963 = vmatprep.subr.bf16.mxu0 0
    %964 = vmatpush1.bf16.msra.mxu0 %v895
    %965 = vmatprep.subr.bf16.mxu0 0
    %966 = vmatpush1.bf16.msra.mxu0 %v896
    %967 = vmatprep.subr.bf16.mxu0 0
    %968 = vmatpush1.bf16.msra.mxu0 %v897
    %969 = vmatprep.subr.bf16.mxu0 0
    %970 = vmatpush1.bf16.msra.mxu0 %v898
    %971 = vmatprep.subr.bf16.mxu0 0
    %972 = vmatpush1.bf16.msra.mxu0 %v899
    %973 = vmatprep.subr.bf16.mxu0 0
    %974 = vmatpush1.bf16.msra.mxu0 %v900
    %975 = vmatprep.subr.bf16.mxu0 0
    %976 = vmatpush1.bf16.msra.mxu0 %v901
    %977 = vmatprep.subr.bf16.mxu0 0
    %978 = vmatpush1.bf16.msra.mxu0 %v902
    %979 = vmatprep.subr.bf16.mxu0 0
    %980 = vmatpush1.bf16.msra.mxu0 %v903
    %981 = vmatprep.subr.bf16.mxu0 0
    %982 = vmatpush1.bf16.msra.mxu0 %v904
    %983 = vmatprep.subr.bf16.mxu0 0
    %984 = vmatpush1.bf16.msra.mxu0 %v905
    %985 = vmatprep.subr.bf16.mxu0 0
    %986 = vmatpush1.bf16.msra.mxu0 %v906
    %987 = vmatprep.mubr.bf16.mxu0 %v696
    %988 = vmatmul.mubr.bf16.gmra.mrb[0].mxu0 %v695
    %v989 = vpop.f32.mrb[0].mxu0
    %v990 = vadd.f32 0.0, %v989
    %v991 = vpop.f32.mrb[0].mxu0
    %v992 = vpop.f32.mrb[0].mxu0
    %v993 = vadd.f32 0.0, %v992
    %v994 = vpop.f32.mrb[0].mxu0
    %995 = vdwg.mxu0
    %996 = vmatprep.subr.bf16.mxu0 0
    %997 = vmatpush1.bf16.msra.mxu0 %v907
    %998 = vmatprep.subr.bf16.mxu0 0
    %999 = vmatpush1.bf16.msra.mxu0 %v908
    %1000 = vmatprep.subr.bf16.mxu0 0
    %1001 = vmatpush1.bf16.msra.mxu0 %v909
    %1002 = vmatprep.subr.bf16.mxu0 0
    %1003 = vmatpush1.bf16.msra.mxu0 %v910
    %1004 = vmatprep.subr.bf16.mxu0 0
    %1005 = vmatpush1.bf16.msra.mxu0 %v911
    %1006 = vmatprep.subr.bf16.mxu0 0
    %1007 = vmatpush1.bf16.msra.mxu0 %v912
    %1008 = vmatprep.subr.bf16.mxu0 0
    %1009 = vmatpush1.bf16.msra.mxu0 %v913
    %1010 = vmatprep.subr.bf16.mxu0 0
    %1011 = vmatpush1.bf16.msra.mxu0 %v914
    %1012 = vmatprep.subr.bf16.mxu0 0
    %1013 = vmatpush1.bf16.msra.mxu0 %v915
    %1014 = vmatprep.subr.bf16.mxu0 0
    %1015 = vmatpush1.bf16.msra.mxu0 %v916
    %1016 = vmatprep.subr.bf16.mxu0 0
    %1017 = vmatpush1.bf16.msra.mxu0 %v917
    %1018 = vmatprep.subr.bf16.mxu0 0
    %1019 = vmatpush1.bf16.msra.mxu0 %v918
    %1020 = vmatprep.subr.bf16.mxu0 0
    %1021 = vmatpush1.bf16.msra.mxu0 %v919
    %1022 = vmatprep.subr.bf16.mxu0 0
    %1023 = vmatpush1.bf16.msra.mxu0 %v920
    %1024 = vmatprep.subr.bf16.mxu0 0
    %1025 = vmatpush1.bf16.msra.mxu0 %v921
    %1026 = vmatprep.subr.bf16.mxu0 0
    %1027 = vmatpush1.bf16.msra.mxu0 %v922
    %1028 = vmatprep.mubr.bf16.mxu0 %v698
    %1029 = vmatmul.mubr.bf16.gmra.mrb[0].mxu0 %v697
    %v1030 = vpop.f32.mrb[0].mxu0
    %v1031 = vadd.f32 %v990, %v1030
    %v1032 = vpop.f32.mrb[0].mxu0
    %v1033 = vpop.f32.mrb[0].mxu0
    %v1034 = vadd.f32 %v993, %v1033
    %v1035 = vpop.f32.mrb[0].mxu0
    %1036 = vdwg.mxu0
    %p1037 = scmp.eq.s32.totalorder 0, 0
    // Predicated region
    $region26: #{tpu_custom_call.1} parent=1 // pred_check
      %p1038 = pneg %p1037
    $region27: #{tpu_custom_call.1} parent=1 // pred_check_branch
      %1040 = sbr.rel (%p1038) target = $region29
    $region28: #{tpu_custom_call.1} parent=1 // pred_region
      %1041 = vst [vmem:[#allocation2] sm:$0xff] %v1031
      %1042 = vst [vmem:[#allocation2 + $0x8] sm:$0xff] %v1034
    $region29: #{tpu_custom_call.1} parent=1 // pred_fallthru
      _
    %p1043 = scmp.gt.s32.totalorder 0, 0
    // Predicated region
    $region30: #{tpu_custom_call.1} parent=1 // pred_check
      %p1044 = pneg %p1043
    $region31: #{tpu_custom_call.1} parent=1 // pred_check_branch
      %1046 = sbr.rel (%p1044) target = $region33
    $region32: #{tpu_custom_call.1} parent=1 // pred_region
      %v1047 = vld [vmem:[#allocation2] sm:$0xff]
      %v1048 = vld [vmem:[#allocation2 + $0x8] sm:$0xff]
      %v1049 = vadd.f32 %v1047, %v1031
      %v1050 = vadd.f32 %v1048, %v1034
      %1051 = vst [vmem:[#allocation2] sm:$0xff] %v1049
      %1052 = vst [vmem:[#allocation2 + $0x8] sm:$0xff] %v1050
    $region33: #{tpu_custom_call.1} parent=1 // pred_fallthru
      _
    // Predicated region
    $region34: #{tpu_custom_call.1} parent=1 // pred_check
      %p1053 = pneg %p1037
    $region35: #{tpu_custom_call.1} parent=1 // pred_check_branch
      %1055 = sbr.rel (%p1053) target = $region37
    $region36: #{tpu_custom_call.1} parent=1 // pred_region
      %v1056 = vld [vmem:[#allocation2] sm:$0xff]
      %v1057 = vld [vmem:[#allocation2 + $0x8] sm:$0xff]
      %v1058 = vpack.c.bf16 %v1057, %v1056
      %v1060 = vunpack.c.l.b16 %v1058
      %v1061 = vunpack.c.h.b16 %v1058
      %v1062 = vpack.c.b16 %v1060, %v1060
      %v1063 = vpack.c.b16 %v1061, %v1061
      %1066 = vst [vmem:[#allocation9] sm:$0xf] %v1062
      %1067 = vst [vmem:[#allocation9 + $0x4] sm:$0xf] %v1063
    $region37: #{tpu_custom_call.1} parent=1 // pred_fallthru
      _
    // Predicated region
    $region38: #{tpu_custom_call.1} parent=1 // pred_check
      _
    $region39: #{tpu_custom_call.1} parent=1 // pred_check_branch
      %1069 = sbr.rel (0) target = $region41
    $region40: #{tpu_custom_call.1} parent=1 // pred_region
      %s1071 = ssub.s32 128, 128
      %1072 = vsyncadd [#allocation5], %s1071
      %s1073 = sshll.u32 [#allocation9], 4
      %s1074 = int_to_ptr.vmem [resolvable:$true] %s1073
      %1079 = dma.vmem_to_hbm [thread:$0]  %s1074, 128, %s3, [#allocation5], 64, 64, 4
    $region41: #{tpu_custom_call.1} parent=1 // pred_fallthru
      _
    // Predicated region
    $region42: #{tpu_custom_call.1} parent=1 // pred_check
      _
    $region43: #{tpu_custom_call.1} parent=1 // pred_check_branch
      %1081 = sbr.rel (0) target = $region45
    $region44: #{tpu_custom_call.1} parent=1 // pred_region
      %1082 = dma.done [#allocation5], 128
    $region45: #{tpu_custom_call.1} parent=1 // pred_fallthru
      _
    %1083 = vsyncpa [#allocation4], 1
    %1084 = vsyncpa [#allocation7], 1
    %1085 = vsyncpa [#allocation5], 1

</llo_original>
